<compile_context>
chip_gen: v7x
topology: tpu7x:2x2x1
jax: 0.10.0
libtpu: 0.0.40
codegen_flags: <defaults>
</compile_context>

<pallas_src>
import jax
import jax.numpy as jnp
from jax.experimental import pallas as pl
from jax.experimental.pallas import tpu as pltpu


def _folded_linear_kernel(x_ref, w_ref, o_ref):
    # x_ref: (TM, F*d_inp)   lane-dense folded input rows
    # w_ref: (F*d_inp, F*d_model) block-diagonal weight (VMEM-resident)
    # o_ref: (TM, F*d_model) lane-dense folded output rows
    o_ref[...] = jnp.dot(
        x_ref[...], w_ref[...], preferred_element_type=jnp.float32
    ).astype(o_ref.dtype)


def _choose_fold(d_inp, d_model, itemsize=4, wbig_budget=2 << 20):
    """Fold factor F: make the folded input 128 lanes wide when possible,
    while keeping the (F*d_inp, F*d_model) block-diagonal weight small."""
    f = 128 // d_inp if 128 % d_inp == 0 else 32
    while f > 4 and (f * d_inp) * (f * d_model) * itemsize > wbig_budget:
        f //= 2
    return max(f, 1)


def _choose_tile(m_folded, tm_cap=1024):
    """Folded-row tile size.  tm_cap=1024 keeps the double-buffered footprint
    (~10 MiB at d_model=32) under the v5e 16 MiB default scoped VMEM and the
    v7x 32 MiB scoped limit.  When everything fits one tile, split in two so
    the grid length is >= 2 (both v7x TensorCores busy)."""
    if m_folded > tm_cap:
        return tm_cap
    if m_folded <= 16:
        return m_folded                      # tiny problem: one full-extent block
    half = -(-m_folded // 2)                 # ceil(m_folded / 2)
    return min(tm_cap, -(-half // 8) * 8)    # round up to sublane multiple of 8


def time_feature_embedding(x, weight, *, tm_cap=1024):
    """x: (B, L, d_inp); weight: (d_model, d_inp) as in nn.Linear. Returns
    (B, L, d_model) = x @ weight.T."""
    B, L, d_inp = x.shape
    d_model, d_inp_w = weight.shape
    assert d_inp_w == d_inp, "weight shape must be (d_model, d_inp)"

    M = B * L
    itemsize = jnp.dtype(x.dtype).itemsize
    F = _choose_fold(d_inp, d_model, itemsize)

    # Pad M up to a multiple of the fold factor (pad rows are zeros -> zero
    # outputs, sliced off below), then fold rows: (M_pad, d_inp) -> (Mf, F*d_inp).
    M_pad = -(-M // F) * F
    x2d = x.reshape(M, d_inp)
    if M_pad != M:
        x2d = jnp.pad(x2d, ((0, M_pad - M), (0, 0)))
    Mf = M_pad // F
    xf = x2d.reshape(Mf, F * d_inp)

    # Block-diagonal weight: F diagonal blocks of W.T -> (F*d_inp, F*d_model).
    # Built once at trace time; the kernel's contraction is a plain (K, N) dot,
    # so no in-kernel transpose/relayout of the RHS is needed.
    w_big = jnp.kron(jnp.eye(F, dtype=weight.dtype), weight.T)

    tm = _choose_tile(Mf, tm_cap)
    grid = (pl.cdiv(Mf, tm),)

    outf = pl.pallas_call(
        _folded_linear_kernel,
        out_shape=jax.ShapeDtypeStruct((Mf, F * d_model), x.dtype),
        grid_spec=pl.GridSpec(
            grid=grid,
            in_specs=[
                # Row tile of the folded input, streamed (double-buffered).
                pl.BlockSpec((tm, F * d_inp), lambda i: (i, 0)),
                # Whole block-diagonal weight; constant index -> VMEM-resident.
                pl.BlockSpec((F * d_inp, F * d_model), lambda i: (0, 0)),
            ],
            # Lane-dense output tile (last dim F*d_model, a multiple of 128 for
            # typical d_model) -> unmasked full-width vector stores.
            out_specs=pl.BlockSpec((tm, F * d_model), lambda i: (i, 0)),
        ),
        compiler_params=pltpu.CompilerParams(
            dimension_semantics=("parallel",),
        ),
    )(xf, w_big)

    out2d = outf.reshape(M_pad, d_model)
    if M_pad != M:
        out2d = out2d[:M]
    return out2d.reshape(B, L, d_model)


if __name__ == "__main__":
    key = jax.random.PRNGKey(0)
    kx, kw, kx2 = jax.random.split(key, 3)

    # freq='h' -> d_inp = 4; small d_model / batch / seq for the smoke test.
    d_model = 32
    d_inp = 4

    # Test 1: tiny shape (single folded block).
    B, L = 2, 8
    x = jax.random.normal(kx, (B, L, d_inp), dtype=jnp.float32)
    # nn.Linear(d_inp, d_model, bias=False).weight has shape (d_model, d_inp).
    weight = jax.random.normal(kw, (d_model, d_inp), dtype=jnp.float32) * 0.1

    out = jax.block_until_ready(time_feature_embedding(x, weight))
    ref = jnp.einsum("bld,md->blm", x, weight)
    assert out.shape == (B, L, d_model)
    assert jnp.allclose(out, ref, atol=1e-5, rtol=1e-5)

    # Test 2: M not a multiple of the fold factor and > one tile -> exercises
    # the zero-pad path, the multi-step grid, and the ragged last block.
    B2, L2 = 3, 700
    x2 = jax.random.normal(kx2, (B2, L2, d_inp), dtype=jnp.float32)
    out2 = jax.block_until_ready(time_feature_embedding(x2, weight))
    ref2 = jnp.einsum("bld,md->blm", x2, weight)
    assert out2.shape == (B2, L2, d_model)
    assert jnp.allclose(out2, ref2, atol=1e-5, rtol=1e-5)

    print("KERNEL_OK")
</pallas_src>

<mosaic_0001>
module attributes {stable_mosaic.version = 11 : i64} {
  func.func @_folded_linear_kernel(%arg0: i32, %arg1: memref<1x128xf32, #tpu.memory_space<vmem>>, %arg2: memref<128x1024xf32, #tpu.memory_space<vmem>>, %arg3: memref<1x1024xf32, #tpu.memory_space<vmem>>) attributes {dimension_semantics = [#tpu.dimension_semantics<parallel>], iteration_bounds = array<i64: 1>, scalar_prefetch = 0 : i64, scratch_operands = 0 : i64, tpu.core_type = #tpu.core_type<tc>, window_params = [{transform_indices = @transform_0, window_bounds = array<i64: 1, 128>}, {pipeline_mode = #tpu.pipeline_mode<synchronous>, transform_indices = @transform_1, window_bounds = array<i64: 128, 1024>}, {transform_indices = @transform_2, window_bounds = array<i64: 1, 1024>}]} {
    %c0 = arith.constant 0 : index
    %c0_0 = arith.constant 0 : index
    %0 = vector.load %arg1[%c0, %c0_0] : memref<1x128xf32, #tpu.memory_space<vmem>>, vector<1x128xf32>
    %c0_1 = arith.constant 0 : index
    %c0_2 = arith.constant 0 : index
    %1 = vector.load %arg2[%c0_1, %c0_2] : memref<128x1024xf32, #tpu.memory_space<vmem>>, vector<128x1024xf32>
    %cst = arith.constant dense<0.000000e+00> : vector<1x1024xf32>
    %2 = tpu.matmul %0, %1, %cst {dimension_numbers = #tpu.dot_dimension_numbers<[1], [0], [0], [1], [0, 0, 1, 1], [], []>} : vector<1x128xf32>, vector<128x1024xf32>, vector<1x1024xf32> -> vector<1x1024xf32>
    %c0_3 = arith.constant 0 : index
    %c0_4 = arith.constant 0 : index
    %3 = vector.load %arg3[%c0_3, %c0_4] : memref<1x1024xf32, #tpu.memory_space<vmem>>, vector<1x1024xf32>
    tpu.vector_store %arg3[%c0_3, %c0_4], %2 {strides = array<i32>} : memref<1x1024xf32, #tpu.memory_space<vmem>>, vector<1x1024xf32>,
    return
  }
  func.func @transform_0(%arg0: i32) -> (i32, i32) {
    %c0_i32 = arith.constant 0 : i32
    %c0_i32_0 = arith.constant 0 : i32
    return %arg0, %c0_i32 : i32, i32
  }
  func.func @transform_1(%arg0: i32) -> (i32, i32) {
    %c0_i32 = arith.constant 0 : i32
    %c0_i32_0 = arith.constant 0 : i32
    %c0_i32_1 = arith.constant 0 : i32
    return %c0_i32, %c0_i32_0 : i32, i32
  }
  func.func @transform_2(%arg0: i32) -> (i32, i32) {
    %c0_i32 = arith.constant 0 : i32
    %c0_i32_0 = arith.constant 0 : i32
    return %arg0, %c0_i32 : i32, i32
  }
}

</mosaic_0001>

<llo_original>
// kernel: tpu_custom_call.1
$region0: #{tpu_custom_call.1}
  #allocation0 [shape = 'u32[]', space=smem, size = 0x4, offset = 0x4, fixed_abs, tag = 'smem constant byte address 0x4 - core index']
  #allocation1 [shape = 'u32[144,128]{1,0:T(1,128)}', space=vmem, size = 0x12000, scoped, tag = 'internal scratch']
  %s0 = inlined_call_operand.hbm [shape: f32[1,128], index: 0, kind: input, shape index: {}]
  %s1 = inlined_call_operand.hbm [shape: f32[128,1024], index: 1, kind: input, shape index: {}]
  %s2 = inlined_call_operand.hbm [shape: f32[1,1024], index: 2, kind: output, shape index: {}]
  %s3 = sld [smem:[#allocation0]]
  $region26: #{tpu_custom_call.1} parent=0
    _
  %s5 = ssub.s32 1, %s3
  %s6 = scalar_select 0, %s5, %s3
  $region1: #{tpu_custom_call.1} parent=0
    #allocation2 [shape = 'u8[512]{0}', space=vmem, size = 0x400, scoped, tag = 'input window, operand 0, single buffered']
    #allocation3 [shape = 's32[1]{0}', space=sflag, size = 0x4, scoped, tag = 'scoped memory for tpu_custom_call.1']
    #allocation4 [shape = 's32[1]{0}', space=sflag, size = 0x4, scoped, tag = 'scoped memory for tpu_custom_call.1']
    #allocation5 [shape = 'u8[524288]{0}', space=vmem, size = 0x80000, scoped, tag = 'input window, operand 1, single buffered']
    #allocation6 [shape = 's32[1]{0}', space=sflag, size = 0x4, scoped, tag = 'scoped memory for tpu_custom_call.1']
    #allocation7 [shape = 'u8[4096]{0}', space=vmem, size = 0x1000, scoped, tag = 'output window, operand 0, single buffered']
    %7 = vsyncpa [#allocation3], 0
    %8 = vsyncpa [#allocation6], 0
    %9 = vsyncpa [#allocation4], 0
    // Predicated region
    $region2: #{tpu_custom_call.1} parent=1 // pred_check
      _
    $region3: #{tpu_custom_call.1} parent=1 // pred_check_branch
      %11 = sbr.rel (0) target = $region5
    $region4: #{tpu_custom_call.1} parent=1 // pred_region
      %s13 = ssub.s32 16, 16
      %14 = vsyncadd [#allocation3], %s13
      %s16 = sshll.u32 [#allocation2], 4
      %s17 = int_to_ptr.vmem [resolvable:$true] %s16
      %19 = dma.hbm_to_vmem [thread:$0]  %s0, 16, %s17, [#allocation3]
    $region5: #{tpu_custom_call.1} parent=1 // pred_fallthru
      _
    // Predicated region
    $region6: #{tpu_custom_call.1} parent=1 // pred_check
      _
    $region7: #{tpu_custom_call.1} parent=1 // pred_check_branch
      %21 = sbr.rel (0) target = $region9
    $region8: #{tpu_custom_call.1} parent=1 // pred_region
      %s23 = ssub.s32 16384, 16384
      %24 = vsyncadd [#allocation6], %s23
      %s25 = sshll.u32 [#allocation5], 4
      %s26 = int_to_ptr.vmem [resolvable:$true] %s25
      %31 = dma.hbm_to_vmem [thread:$0]  %s1, 16384, %s26, [#allocation6], 1024, 1024, 64
    $region9: #{tpu_custom_call.1} parent=1 // pred_fallthru
      _
    // Predicated region
    $region10: #{tpu_custom_call.1} parent=1 // pred_check
      _
    $region11: #{tpu_custom_call.1} parent=1 // pred_check_branch
      %33 = sbr.rel (0) target = $region13
    $region12: #{tpu_custom_call.1} parent=1 // pred_region
      %34 = dma.done [#allocation3], 16
    $region13: #{tpu_custom_call.1} parent=1 // pred_fallthru
      _
    // Predicated region
    $region14: #{tpu_custom_call.1} parent=1 // pred_check
      _
    $region15: #{tpu_custom_call.1} parent=1 // pred_check_branch
      %36 = sbr.rel (0) target = $region17
    $region16: #{tpu_custom_call.1} parent=1 // pred_region
      %37 = dma.done [#allocation6], 16384
    $region17: #{tpu_custom_call.1} parent=1 // pred_fallthru
      _
    %v38 = vld [vmem:[#allocation2] sm:$0x1]
    %v39 = vld [vmem:[#allocation5] sm:$0xff]
    %v40 = vld [vmem:[#allocation5 + $0x8] sm:$0xff]
    %v41 = vld [vmem:[#allocation5 + $0x10] sm:$0xff]
    %v42 = vld [vmem:[#allocation5 + $0x18] sm:$0xff]
    %v43 = vld [vmem:[#allocation5 + $0x20] sm:$0xff]
    %v44 = vld [vmem:[#allocation5 + $0x28] sm:$0xff]
    %v45 = vld [vmem:[#allocation5 + $0x30] sm:$0xff]
    %v46 = vld [vmem:[#allocation5 + $0x38] sm:$0xff]
    %v47 = vld [vmem:[#allocation5 + $0x40] sm:$0xff]
    %v48 = vld [vmem:[#allocation5 + $0x48] sm:$0xff]
    %v49 = vld [vmem:[#allocation5 + $0x50] sm:$0xff]
    %v50 = vld [vmem:[#allocation5 + $0x58] sm:$0xff]
    %v51 = vld [vmem:[#allocation5 + $0x60] sm:$0xff]
    %v52 = vld [vmem:[#allocation5 + $0x68] sm:$0xff]
    %v53 = vld [vmem:[#allocation5 + $0x70] sm:$0xff]
    %v54 = vld [vmem:[#allocation5 + $0x78] sm:$0xff]
    %v55 = vld [vmem:[#allocation5 + $0x80] sm:$0xff]
    %v56 = vld [vmem:[#allocation5 + $0x88] sm:$0xff]
    %v57 = vld [vmem:[#allocation5 + $0x90] sm:$0xff]
    %v58 = vld [vmem:[#allocation5 + $0x98] sm:$0xff]
    %v59 = vld [vmem:[#allocation5 + $0xa0] sm:$0xff]
    %v60 = vld [vmem:[#allocation5 + $0xa8] sm:$0xff]
    %v61 = vld [vmem:[#allocation5 + $0xb0] sm:$0xff]
    %v62 = vld [vmem:[#allocation5 + $0xb8] sm:$0xff]
    %v63 = vld [vmem:[#allocation5 + $0xc0] sm:$0xff]
    %v64 = vld [vmem:[#allocation5 + $0xc8] sm:$0xff]
    %v65 = vld [vmem:[#allocation5 + $0xd0] sm:$0xff]
    %v66 = vld [vmem:[#allocation5 + $0xd8] sm:$0xff]
    %v67 = vld [vmem:[#allocation5 + $0xe0] sm:$0xff]
    %v68 = vld [vmem:[#allocation5 + $0xe8] sm:$0xff]
    %v69 = vld [vmem:[#allocation5 + $0xf0] sm:$0xff]
    %v70 = vld [vmem:[#allocation5 + $0xf8] sm:$0xff]
    %v71 = vld [vmem:[#allocation5 + $0x100] sm:$0xff]
    %v72 = vld [vmem:[#allocation5 + $0x108] sm:$0xff]
    %v73 = vld [vmem:[#allocation5 + $0x110] sm:$0xff]
    %v74 = vld [vmem:[#allocation5 + $0x118] sm:$0xff]
    %v75 = vld [vmem:[#allocation5 + $0x120] sm:$0xff]
    %v76 = vld [vmem:[#allocation5 + $0x128] sm:$0xff]
    %v77 = vld [vmem:[#allocation5 + $0x130] sm:$0xff]
    %v78 = vld [vmem:[#allocation5 + $0x138] sm:$0xff]
    %v79 = vld [vmem:[#allocation5 + $0x140] sm:$0xff]
    %v80 = vld [vmem:[#allocation5 + $0x148] sm:$0xff]
    %v81 = vld [vmem:[#allocation5 + $0x150] sm:$0xff]
    %v82 = vld [vmem:[#allocation5 + $0x158] sm:$0xff]
    %v83 = vld [vmem:[#allocation5 + $0x160] sm:$0xff]
    %v84 = vld [vmem:[#allocation5 + $0x168] sm:$0xff]
    %v85 = vld [vmem:[#allocation5 + $0x170] sm:$0xff]
    %v86 = vld [vmem:[#allocation5 + $0x178] sm:$0xff]
    %v87 = vld [vmem:[#allocation5 + $0x180] sm:$0xff]
    %v88 = vld [vmem:[#allocation5 + $0x188] sm:$0xff]
    %v89 = vld [vmem:[#allocation5 + $0x190] sm:$0xff]
    %v90 = vld [vmem:[#allocation5 + $0x198] sm:$0xff]
    %v91 = vld [vmem:[#allocation5 + $0x1a0] sm:$0xff]
    %v92 = vld [vmem:[#allocation5 + $0x1a8] sm:$0xff]
    %v93 = vld [vmem:[#allocation5 + $0x1b0] sm:$0xff]
    %v94 = vld [vmem:[#allocation5 + $0x1b8] sm:$0xff]
    %v95 = vld [vmem:[#allocation5 + $0x1c0] sm:$0xff]
    %v96 = vld [vmem:[#allocation5 + $0x1c8] sm:$0xff]
    %v97 = vld [vmem:[#allocation5 + $0x1d0] sm:$0xff]
    %v98 = vld [vmem:[#allocation5 + $0x1d8] sm:$0xff]
    %v99 = vld [vmem:[#allocation5 + $0x1e0] sm:$0xff]
    %v100 = vld [vmem:[#allocation5 + $0x1e8] sm:$0xff]
    %v101 = vld [vmem:[#allocation5 + $0x1f0] sm:$0xff]
    %v102 = vld [vmem:[#allocation5 + $0x1f8] sm:$0xff]
    %v103 = vld [vmem:[#allocation5 + $0x200] sm:$0xff]
    %v104 = vld [vmem:[#allocation5 + $0x208] sm:$0xff]
    %v105 = vld [vmem:[#allocation5 + $0x210] sm:$0xff]
    %v106 = vld [vmem:[#allocation5 + $0x218] sm:$0xff]
    %v107 = vld [vmem:[#allocation5 + $0x220] sm:$0xff]
    %v108 = vld [vmem:[#allocation5 + $0x228] sm:$0xff]
    %v109 = vld [vmem:[#allocation5 + $0x230] sm:$0xff]
    %v110 = vld [vmem:[#allocation5 + $0x238] sm:$0xff]
    %v111 = vld [vmem:[#allocation5 + $0x240] sm:$0xff]
    %v112 = vld [vmem:[#allocation5 + $0x248] sm:$0xff]
    %v113 = vld [vmem:[#allocation5 + $0x250] sm:$0xff]
    %v114 = vld [vmem:[#allocation5 + $0x258] sm:$0xff]
    %v115 = vld [vmem:[#allocation5 + $0x260] sm:$0xff]
    %v116 = vld [vmem:[#allocation5 + $0x268] sm:$0xff]
    %v117 = vld [vmem:[#allocation5 + $0x270] sm:$0xff]
    %v118 = vld [vmem:[#allocation5 + $0x278] sm:$0xff]
    %v119 = vld [vmem:[#allocation5 + $0x280] sm:$0xff]
    %v120 = vld [vmem:[#allocation5 + $0x288] sm:$0xff]
    %v121 = vld [vmem:[#allocation5 + $0x290] sm:$0xff]
    %v122 = vld [vmem:[#allocation5 + $0x298] sm:$0xff]
    %v123 = vld [vmem:[#allocation5 + $0x2a0] sm:$0xff]
    %v124 = vld [vmem:[#allocation5 + $0x2a8] sm:$0xff]
    %v125 = vld [vmem:[#allocation5 + $0x2b0] sm:$0xff]
    %v126 = vld [vmem:[#allocation5 + $0x2b8] sm:$0xff]
    %v127 = vld [vmem:[#allocation5 + $0x2c0] sm:$0xff]
    %v128 = vld [vmem:[#allocation5 + $0x2c8] sm:$0xff]
    %v129 = vld [vmem:[#allocation5 + $0x2d0] sm:$0xff]
    %v130 = vld [vmem:[#allocation5 + $0x2d8] sm:$0xff]
    %v131 = vld [vmem:[#allocation5 + $0x2e0] sm:$0xff]
    %v132 = vld [vmem:[#allocation5 + $0x2e8] sm:$0xff]
    %v133 = vld [vmem:[#allocation5 + $0x2f0] sm:$0xff]
    %v134 = vld [vmem:[#allocation5 + $0x2f8] sm:$0xff]
    %v135 = vld [vmem:[#allocation5 + $0x300] sm:$0xff]
    %v136 = vld [vmem:[#allocation5 + $0x308] sm:$0xff]
    %v137 = vld [vmem:[#allocation5 + $0x310] sm:$0xff]
    %v138 = vld [vmem:[#allocation5 + $0x318] sm:$0xff]
    %v139 = vld [vmem:[#allocation5 + $0x320] sm:$0xff]
    %v140 = vld [vmem:[#allocation5 + $0x328] sm:$0xff]
    %v141 = vld [vmem:[#allocation5 + $0x330] sm:$0xff]
    %v142 = vld [vmem:[#allocation5 + $0x338] sm:$0xff]
    %v143 = vld [vmem:[#allocation5 + $0x340] sm:$0xff]
    %v144 = vld [vmem:[#allocation5 + $0x348] sm:$0xff]
    %v145 = vld [vmem:[#allocation5 + $0x350] sm:$0xff]
    %v146 = vld [vmem:[#allocation5 + $0x358] sm:$0xff]
    %v147 = vld [vmem:[#allocation5 + $0x360] sm:$0xff]
    %v148 = vld [vmem:[#allocation5 + $0x368] sm:$0xff]
    %v149 = vld [vmem:[#allocation5 + $0x370] sm:$0xff]
    %v150 = vld [vmem:[#allocation5 + $0x378] sm:$0xff]
    %v151 = vld [vmem:[#allocation5 + $0x380] sm:$0xff]
    %v152 = vld [vmem:[#allocation5 + $0x388] sm:$0xff]
    %v153 = vld [vmem:[#allocation5 + $0x390] sm:$0xff]
    %v154 = vld [vmem:[#allocation5 + $0x398] sm:$0xff]
    %v155 = vld [vmem:[#allocation5 + $0x3a0] sm:$0xff]
    %v156 = vld [vmem:[#allocation5 + $0x3a8] sm:$0xff]
    %v157 = vld [vmem:[#allocation5 + $0x3b0] sm:$0xff]
    %v158 = vld [vmem:[#allocation5 + $0x3b8] sm:$0xff]
    %v159 = vld [vmem:[#allocation5 + $0x3c0] sm:$0xff]
    %v160 = vld [vmem:[#allocation5 + $0x3c8] sm:$0xff]
    %v161 = vld [vmem:[#allocation5 + $0x3d0] sm:$0xff]
    %v162 = vld [vmem:[#allocation5 + $0x3d8] sm:$0xff]
    %v163 = vld [vmem:[#allocation5 + $0x3e0] sm:$0xff]
    %v164 = vld [vmem:[#allocation5 + $0x3e8] sm:$0xff]
    %v165 = vld [vmem:[#allocation5 + $0x3f0] sm:$0xff]
    %v166 = vld [vmem:[#allocation5 + $0x3f8] sm:$0xff]
    %167 = vmatprep.subr.mxu0 %v40
    %168 = vmatpush1.msra.mxu0 %v39
    %169 = vmatprep.subr.mxu0 %v48
    %170 = vmatpush1.msra.mxu0 %v47
    %171 = vmatprep.subr.mxu0 %v56
    %172 = vmatpush1.msra.mxu0 %v55
    %173 = vmatprep.subr.mxu0 %v64
    %174 = vmatpush1.msra.mxu0 %v63
    %175 = vmatprep.subr.mxu0 %v72
    %176 = vmatpush1.msra.mxu0 %v71
    %177 = vmatprep.subr.mxu0 %v80
    %178 = vmatpush1.msra.mxu0 %v79
    %179 = vmatprep.subr.mxu0 %v88
    %180 = vmatpush1.msra.mxu0 %v87
    %181 = vmatprep.subr.mxu0 %v96
    %182 = vmatpush1.msra.mxu0 %v95
    %183 = vmatprep.subr.mxu0 %v104
    %184 = vmatpush1.msra.mxu0 %v103
    %185 = vmatprep.subr.mxu0 %v112
    %186 = vmatpush1.msra.mxu0 %v111
    %187 = vmatprep.subr.mxu0 %v120
    %188 = vmatpush1.msra.mxu0 %v119
    %189 = vmatprep.subr.mxu0 %v128
    %190 = vmatpush1.msra.mxu0 %v127
    %191 = vmatprep.subr.mxu0 %v136
    %192 = vmatpush1.msra.mxu0 %v135
    %193 = vmatprep.subr.mxu0 %v144
    %194 = vmatpush1.msra.mxu0 %v143
    %195 = vmatprep.subr.mxu0 %v152
    %196 = vmatpush1.msra.mxu0 %v151
    %197 = vmatprep.subr.mxu0 %v160
    %198 = vmatpush1.msra.mxu0 %v159
    %199 = vmatprep.subr.mxu0 0.0
    %200 = vmatpush1.msra.mxu0 0.0
    %201 = vmatprep.subr.mxu0 0.0
    %202 = vmatpush1.msra.mxu0 0.0
    %203 = vmatprep.subr.mxu0 0.0
    %204 = vmatpush1.msra.mxu0 0.0
    %205 = vmatprep.subr.mxu0 0.0
    %206 = vmatpush1.msra.mxu0 0.0
    %207 = vmatprep.subr.mxu0 0.0
    %208 = vmatpush1.msra.mxu0 0.0
    %209 = vmatprep.subr.mxu0 0.0
    %210 = vmatpush1.msra.mxu0 0.0
    %211 = vmatprep.subr.mxu0 0.0
    %212 = vmatpush1.msra.mxu0 0.0
    %213 = vmatprep.subr.mxu0 0.0
    %214 = vmatpush1.msra.mxu0 0.0
    %215 = vmatprep.subr.mxu0 0.0
    %216 = vmatpush1.msra.mxu0 0.0
    %217 = vmatprep.subr.mxu0 0.0
    %218 = vmatpush1.msra.mxu0 0.0
    %219 = vmatprep.subr.mxu0 0.0
    %220 = vmatpush1.msra.mxu0 0.0
    %221 = vmatprep.subr.mxu0 0.0
    %222 = vmatpush1.msra.mxu0 0.0
    %223 = vmatprep.subr.mxu0 0.0
    %224 = vmatpush1.msra.mxu0 0.0
    %225 = vmatprep.subr.mxu0 0.0
    %226 = vmatpush1.msra.mxu0 0.0
    %227 = vmatprep.subr.mxu0 0.0
    %228 = vmatpush1.msra.mxu0 0.0
    %229 = vmatprep.subr.mxu0 0.0
    %230 = vmatpush1.msra.mxu0 0.0
    %231 = vmatprep.mubr.f32.mxu0 0.0
    %232 = vmatmul.mubr.f32.gmra.mrb[0].mxu0 %v38
    %v233 = vpop.f32.mrb[0].mxu0
    %v234 = vadd.f32 0.0, %v233
    %v235 = vpop.f32.mrb[0].mxu0
    %v236 = vadd.f32 0.0, %v235
    %237 = vdwg.mxu0
    %238 = vmatprep.subr.mxu0 %v42
    %239 = vmatpush1.msra.mxu0 %v41
    %240 = vmatprep.subr.mxu0 %v50
    %241 = vmatpush1.msra.mxu0 %v49
    %242 = vmatprep.subr.mxu0 %v58
    %243 = vmatpush1.msra.mxu0 %v57
    %244 = vmatprep.subr.mxu0 %v66
    %245 = vmatpush1.msra.mxu0 %v65
    %246 = vmatprep.subr.mxu0 %v74
    %247 = vmatpush1.msra.mxu0 %v73
    %248 = vmatprep.subr.mxu0 %v82
    %249 = vmatpush1.msra.mxu0 %v81
    %250 = vmatprep.subr.mxu0 %v90
    %251 = vmatpush1.msra.mxu0 %v89
    %252 = vmatprep.subr.mxu0 %v98
    %253 = vmatpush1.msra.mxu0 %v97
    %254 = vmatprep.subr.mxu0 %v106
    %255 = vmatpush1.msra.mxu0 %v105
    %256 = vmatprep.subr.mxu0 %v114
    %257 = vmatpush1.msra.mxu0 %v113
    %258 = vmatprep.subr.mxu0 %v122
    %259 = vmatpush1.msra.mxu0 %v121
    %260 = vmatprep.subr.mxu0 %v130
    %261 = vmatpush1.msra.mxu0 %v129
    %262 = vmatprep.subr.mxu0 %v138
    %263 = vmatpush1.msra.mxu0 %v137
    %264 = vmatprep.subr.mxu0 %v146
    %265 = vmatpush1.msra.mxu0 %v145
    %266 = vmatprep.subr.mxu0 %v154
    %267 = vmatpush1.msra.mxu0 %v153
    %268 = vmatprep.subr.mxu0 %v162
    %269 = vmatpush1.msra.mxu0 %v161
    %270 = vmatprep.subr.mxu0 0.0
    %271 = vmatpush1.msra.mxu0 0.0
    %272 = vmatprep.subr.mxu0 0.0
    %273 = vmatpush1.msra.mxu0 0.0
    %274 = vmatprep.subr.mxu0 0.0
    %275 = vmatpush1.msra.mxu0 0.0
    %276 = vmatprep.subr.mxu0 0.0
    %277 = vmatpush1.msra.mxu0 0.0
    %278 = vmatprep.subr.mxu0 0.0
    %279 = vmatpush1.msra.mxu0 0.0
    %280 = vmatprep.subr.mxu0 0.0
    %281 = vmatpush1.msra.mxu0 0.0
    %282 = vmatprep.subr.mxu0 0.0
    %283 = vmatpush1.msra.mxu0 0.0
    %284 = vmatprep.subr.mxu0 0.0
    %285 = vmatpush1.msra.mxu0 0.0
    %286 = vmatprep.subr.mxu0 0.0
    %287 = vmatpush1.msra.mxu0 0.0
    %288 = vmatprep.subr.mxu0 0.0
    %289 = vmatpush1.msra.mxu0 0.0
    %290 = vmatprep.subr.mxu0 0.0
    %291 = vmatpush1.msra.mxu0 0.0
    %292 = vmatprep.subr.mxu0 0.0
    %293 = vmatpush1.msra.mxu0 0.0
    %294 = vmatprep.subr.mxu0 0.0
    %295 = vmatpush1.msra.mxu0 0.0
    %296 = vmatprep.subr.mxu0 0.0
    %297 = vmatpush1.msra.mxu0 0.0
    %298 = vmatprep.subr.mxu0 0.0
    %299 = vmatpush1.msra.mxu0 0.0
    %300 = vmatprep.subr.mxu0 0.0
    %301 = vmatpush1.msra.mxu0 0.0
    %302 = vmatprep.mubr.f32.mxu0 0.0
    %303 = vmatmul.mubr.f32.gmra.mrb[0].mxu0 %v38
    %v304 = vpop.f32.mrb[0].mxu0
    %v305 = vadd.f32 0.0, %v304
    %v306 = vpop.f32.mrb[0].mxu0
    %v307 = vadd.f32 0.0, %v306
    %308 = vdwg.mxu0
    %309 = vmatprep.subr.mxu0 %v44
    %310 = vmatpush1.msra.mxu0 %v43
    %311 = vmatprep.subr.mxu0 %v52
    %312 = vmatpush1.msra.mxu0 %v51
    %313 = vmatprep.subr.mxu0 %v60
    %314 = vmatpush1.msra.mxu0 %v59
    %315 = vmatprep.subr.mxu0 %v68
    %316 = vmatpush1.msra.mxu0 %v67
    %317 = vmatprep.subr.mxu0 %v76
    %318 = vmatpush1.msra.mxu0 %v75
    %319 = vmatprep.subr.mxu0 %v84
    %320 = vmatpush1.msra.mxu0 %v83
    %321 = vmatprep.subr.mxu0 %v92
    %322 = vmatpush1.msra.mxu0 %v91
    %323 = vmatprep.subr.mxu0 %v100
    %324 = vmatpush1.msra.mxu0 %v99
    %325 = vmatprep.subr.mxu0 %v108
    %326 = vmatpush1.msra.mxu0 %v107
    %327 = vmatprep.subr.mxu0 %v116
    %328 = vmatpush1.msra.mxu0 %v115
    %329 = vmatprep.subr.mxu0 %v124
    %330 = vmatpush1.msra.mxu0 %v123
    %331 = vmatprep.subr.mxu0 %v132
    %332 = vmatpush1.msra.mxu0 %v131
    %333 = vmatprep.subr.mxu0 %v140
    %334 = vmatpush1.msra.mxu0 %v139
    %335 = vmatprep.subr.mxu0 %v148
    %336 = vmatpush1.msra.mxu0 %v147
    %337 = vmatprep.subr.mxu0 %v156
    %338 = vmatpush1.msra.mxu0 %v155
    %339 = vmatprep.subr.mxu0 %v164
    %340 = vmatpush1.msra.mxu0 %v163
    %341 = vmatprep.subr.mxu0 0.0
    %342 = vmatpush1.msra.mxu0 0.0
    %343 = vmatprep.subr.mxu0 0.0
    %344 = vmatpush1.msra.mxu0 0.0
    %345 = vmatprep.subr.mxu0 0.0
    %346 = vmatpush1.msra.mxu0 0.0
    %347 = vmatprep.subr.mxu0 0.0
    %348 = vmatpush1.msra.mxu0 0.0
    %349 = vmatprep.subr.mxu0 0.0
    %350 = vmatpush1.msra.mxu0 0.0
    %351 = vmatprep.subr.mxu0 0.0
    %352 = vmatpush1.msra.mxu0 0.0
    %353 = vmatprep.subr.mxu0 0.0
    %354 = vmatpush1.msra.mxu0 0.0
    %355 = vmatprep.subr.mxu0 0.0
    %356 = vmatpush1.msra.mxu0 0.0
    %357 = vmatprep.subr.mxu0 0.0
    %358 = vmatpush1.msra.mxu0 0.0
    %359 = vmatprep.subr.mxu0 0.0
    %360 = vmatpush1.msra.mxu0 0.0
    %361 = vmatprep.subr.mxu0 0.0
    %362 = vmatpush1.msra.mxu0 0.0
    %363 = vmatprep.subr.mxu0 0.0
    %364 = vmatpush1.msra.mxu0 0.0
    %365 = vmatprep.subr.mxu0 0.0
    %366 = vmatpush1.msra.mxu0 0.0
    %367 = vmatprep.subr.mxu0 0.0
    %368 = vmatpush1.msra.mxu0 0.0
    %369 = vmatprep.subr.mxu0 0.0
    %370 = vmatpush1.msra.mxu0 0.0
    %371 = vmatprep.subr.mxu0 0.0
    %372 = vmatpush1.msra.mxu0 0.0
    %373 = vmatprep.mubr.f32.mxu0 0.0
    %374 = vmatmul.mubr.f32.gmra.mrb[0].mxu0 %v38
    %v375 = vpop.f32.mrb[0].mxu0
    %v376 = vadd.f32 0.0, %v375
    %v377 = vpop.f32.mrb[0].mxu0
    %v378 = vadd.f32 0.0, %v377
    %379 = vdwg.mxu0
    %380 = vmatprep.subr.mxu0 %v46
    %381 = vmatpush1.msra.mxu0 %v45
    %382 = vmatprep.subr.mxu0 %v54
    %383 = vmatpush1.msra.mxu0 %v53
    %384 = vmatprep.subr.mxu0 %v62
    %385 = vmatpush1.msra.mxu0 %v61
    %386 = vmatprep.subr.mxu0 %v70
    %387 = vmatpush1.msra.mxu0 %v69
    %388 = vmatprep.subr.mxu0 %v78
    %389 = vmatpush1.msra.mxu0 %v77
    %390 = vmatprep.subr.mxu0 %v86
    %391 = vmatpush1.msra.mxu0 %v85
    %392 = vmatprep.subr.mxu0 %v94
    %393 = vmatpush1.msra.mxu0 %v93
    %394 = vmatprep.subr.mxu0 %v102
    %395 = vmatpush1.msra.mxu0 %v101
    %396 = vmatprep.subr.mxu0 %v110
    %397 = vmatpush1.msra.mxu0 %v109
    %398 = vmatprep.subr.mxu0 %v118
    %399 = vmatpush1.msra.mxu0 %v117
    %400 = vmatprep.subr.mxu0 %v126
    %401 = vmatpush1.msra.mxu0 %v125
    %402 = vmatprep.subr.mxu0 %v134
    %403 = vmatpush1.msra.mxu0 %v133
    %404 = vmatprep.subr.mxu0 %v142
    %405 = vmatpush1.msra.mxu0 %v141
    %406 = vmatprep.subr.mxu0 %v150
    %407 = vmatpush1.msra.mxu0 %v149
    %408 = vmatprep.subr.mxu0 %v158
    %409 = vmatpush1.msra.mxu0 %v157
    %410 = vmatprep.subr.mxu0 %v166
    %411 = vmatpush1.msra.mxu0 %v165
    %412 = vmatprep.subr.mxu0 0.0
    %413 = vmatpush1.msra.mxu0 0.0
    %414 = vmatprep.subr.mxu0 0.0
    %415 = vmatpush1.msra.mxu0 0.0
    %416 = vmatprep.subr.mxu0 0.0
    %417 = vmatpush1.msra.mxu0 0.0
    %418 = vmatprep.subr.mxu0 0.0
    %419 = vmatpush1.msra.mxu0 0.0
    %420 = vmatprep.subr.mxu0 0.0
    %421 = vmatpush1.msra.mxu0 0.0
    %422 = vmatprep.subr.mxu0 0.0
    %423 = vmatpush1.msra.mxu0 0.0
    %424 = vmatprep.subr.mxu0 0.0
    %425 = vmatpush1.msra.mxu0 0.0
    %426 = vmatprep.subr.mxu0 0.0
    %427 = vmatpush1.msra.mxu0 0.0
    %428 = vmatprep.subr.mxu0 0.0
    %429 = vmatpush1.msra.mxu0 0.0
    %430 = vmatprep.subr.mxu0 0.0
    %431 = vmatpush1.msra.mxu0 0.0
    %432 = vmatprep.subr.mxu0 0.0
    %433 = vmatpush1.msra.mxu0 0.0
    %434 = vmatprep.subr.mxu0 0.0
    %435 = vmatpush1.msra.mxu0 0.0
    %436 = vmatprep.subr.mxu0 0.0
    %437 = vmatpush1.msra.mxu0 0.0
    %438 = vmatprep.subr.mxu0 0.0
    %439 = vmatpush1.msra.mxu0 0.0
    %440 = vmatprep.subr.mxu0 0.0
    %441 = vmatpush1.msra.mxu0 0.0
    %442 = vmatprep.subr.mxu0 0.0
    %443 = vmatpush1.msra.mxu0 0.0
    %444 = vmatprep.mubr.f32.mxu0 0.0
    %445 = vmatmul.mubr.f32.gmra.mrb[0].mxu0 %v38
    %v446 = vpop.f32.mrb[0].mxu0
    %v447 = vadd.f32 0.0, %v446
    %v448 = vpop.f32.mrb[0].mxu0
    %v449 = vadd.f32 0.0, %v448
    %450 = vdwg.mxu0
    %v459 = vcombine.low %v234, %v236
    %v460 = vcombine.low %v305, %v307
    %v461 = vcombine.low %v376, %v378
    %v462 = vcombine.low %v447, %v449
    %v464 = vunpack.c.l.s4 1966171168
    %v465 = vunpack.c.0.s8 %v464
    %v466 = vlaneseq
    %v467 = vshrl.u32 %v466, 7
    %v468 = vsub.s32 %v465, %v467
    %v469 = vrot.slane %v459, %v468
    %v471 = vunpack.c.l.s4 1966171168
    %v472 = vunpack.c.0.s8 %v471
    %v473 = vlaneseq
    %v474 = vshrl.u32 %v473, 7
    %v475 = vsub.s32 %v472, %v474
    %v476 = vrot.slane %v460, %v475
    %v478 = vunpack.c.l.s4 1966171168
    %v479 = vunpack.c.0.s8 %v478
    %v480 = vlaneseq
    %v481 = vshrl.u32 %v480, 7
    %v482 = vsub.s32 %v479, %v481
    %v483 = vrot.slane %v461, %v482
    %v485 = vunpack.c.l.s4 1966171168
    %v486 = vunpack.c.0.s8 %v485
    %v487 = vlaneseq
    %v488 = vshrl.u32 %v487, 7
    %v489 = vsub.s32 %v486, %v488
    %v490 = vrot.slane %v462, %v489
    %v491 = vcombine.low %v469, %v476
    %v492 = vcombine.low %v483, %v490
    %v494 = vunpack.c.l.s4 1966171168
    %v495 = vunpack.c.0.s8 %v494
    %v496 = vlaneseq
    %v497 = vshrl.u32 %v496, 7
    %v498 = vsub.s32 %v495, %v497
    %v499 = vrot.slane %v491, %v498
    %v501 = vunpack.c.l.s4 1966171168
    %v502 = vunpack.c.0.s8 %v501
    %v503 = vlaneseq
    %v504 = vshrl.u32 %v503, 7
    %v505 = vsub.s32 %v502, %v504
    %v506 = vrot.slane %v492, %v505
    %v507 = vcombine.low %v499, %v506
    %509 = vst [vmem:[#allocation7] sm:$0xff] %v507
    // Predicated region
    $region18: #{tpu_custom_call.1} parent=1 // pred_check
      _
    $region19: #{tpu_custom_call.1} parent=1 // pred_check_branch
      %511 = sbr.rel (0) target = $region21
    $region20: #{tpu_custom_call.1} parent=1 // pred_region
      %s513 = ssub.s32 128, 128
      %514 = vsyncadd [#allocation4], %s513
      %s516 = sshll.u32 [#allocation7], 4
      %s517 = int_to_ptr.vmem [resolvable:$true] %s516
      %519 = dma.vmem_to_hbm [thread:$0]  %s517, 128, %s2, [#allocation4]
    $region21: #{tpu_custom_call.1} parent=1 // pred_fallthru
      _
    // Predicated region
    $region22: #{tpu_custom_call.1} parent=1 // pred_check
      _
    $region23: #{tpu_custom_call.1} parent=1 // pred_check_branch
      %521 = sbr.rel (0) target = $region25
    $region24: #{tpu_custom_call.1} parent=1 // pred_region
      %522 = dma.done [#allocation4], 128
    $region25: #{tpu_custom_call.1} parent=1 // pred_fallthru
      _
    %523 = vsyncpa [#allocation3], 1
    %524 = vsyncpa [#allocation6], 1
    %525 = vsyncpa [#allocation4], 1

</llo_original>
